<compile_context>
chip_gen: v5e
topology: v5e:2x2
jax: 0.10.0
libtpu: 0.0.40
codegen_flags: <defaults>
</compile_context>

<pallas_src>
import functools
import math

import jax
import jax.numpy as jnp
from jax.experimental import pallas as pl
from jax.experimental.pallas import tpu as pltpu


def _cdiv(a, b):
    return -(-a // b)


def _round_up(a, m):
    return _cdiv(a, m) * m


# ---------------------------------------------------------------------------
# One-time probe: direction of pltpu.roll (cached).  Guarantees correct lane
# pairing whatever the rotate convention is; falls back to jnp.roll on error.
# ---------------------------------------------------------------------------

@functools.lru_cache(maxsize=None)
def _roll_mode():
    """Returns ('pltpu', numpy_like) or ('jnp', True)."""
    try:
        def _probe(x_ref, o_ref):
            o_ref[...] = pltpu.roll(x_ref[...], 1, axis=1)

        x = jnp.broadcast_to(jnp.arange(128, dtype=jnp.float32), (8, 128))
        out = pl.pallas_call(
            _probe, out_shape=jax.ShapeDtypeStruct((8, 128), jnp.float32))(x)
        val = float(jax.device_get(out)[0, 0])
        if val == 127.0:      # np.roll convention: result[l] = v[l - shift]
            return ("pltpu", True)
        if val == 1.0:        # opposite convention: result[l] = v[l + shift]
            return ("pltpu", False)
        return ("jnp", True)
    except Exception:
        return ("jnp", True)


def _vmem_budget_bytes():
    """Per-generation VMEM budget (explicit vmem_limit_bytes)."""
    try:
        cap = int(pltpu.get_tpu_info().vmem_capacity_bytes)
    except Exception:
        cap = 64 * 1024 * 1024          # conservative (v7x-sized) fallback
    # leave headroom; never ask for more than ~100 MiB even on 128 MiB parts
    return max(32 * 1024 * 1024, min(cap * 3 // 4, 100 * 1024 * 1024))


# ---------------------------------------------------------------------------
# Kernels
# ---------------------------------------------------------------------------

def _interleaved_bilinear_kernel(w_ref, s_ref, x_ref, o_ref, *,
                                 d, roll_impl, roll_numpy_like):
    """Small-d fast path on the natural interleaved layout.

    w_ref: (d, W) f32    lane-pattern weights (W = lcm(d, 128)); w[s, d*p+i] is
                         B[i,i] for s==0 and B[i,i+s]+B[i+s,i] (0 past the point
                         boundary) otherwise.
    s_ref: (W, wy) f32   0/1 segment-sum matrix compacting groups of d lanes.
    x_ref: (tb, W)       tile of x viewed as rows of wy interleaved points.
    o_ref: (tb, wy)      per-point results, dense stores, final dtype.
    """
    v = x_ref[...].astype(jnp.float32)                       # (tb, W)
    W = v.shape[-1]
    t = w_ref[pl.ds(0, 1), :] * v                            # s = 0 term
    for s in range(1, d):
        if roll_impl == "pltpu":
            shift = (W - s) if roll_numpy_like else s        # -> v[(l+s) mod W]
            vs = pltpu.roll(v, shift, axis=1)
        else:
            vs = jnp.roll(v, -s, axis=1)
        t = t + w_ref[pl.ds(s, 1), :] * vs
    # acc[l] = v[l] * sum_s w_s[l] * v[l+s]; segment-sum groups of d lanes (MXU).
    y = jnp.dot(v * t, s_ref[...], preferred_element_type=jnp.float32)
    o_ref[...] = y.astype(o_ref.dtype)


def _rowwise_bilinear_kernel(b_ref, x_ref, o_ref):
    """Fallback (large d, or batch not divisible by the fast-path group size).

    b_ref: (d, d) in the dot dtype (bf16 stays bf16 -> native MXU).
    x_ref: (tb, d) rows of x in their native dtype.
    o_ref: (tb, 1) per-row results in the final dtype.
    """
    xv = x_ref[...]
    t = jnp.dot(xv.astype(b_ref.dtype), b_ref[...],
                preferred_element_type=jnp.float32)          # (tb, d)
    y = jnp.sum(xv.astype(jnp.float32) * t, axis=1, keepdims=True)
    o_ref[...] = y.astype(o_ref.dtype)


# ---------------------------------------------------------------------------
# Wrapper
# ---------------------------------------------------------------------------

def _pick_rows(total_rows, bytes_per_row, usable_bytes, row_bytes_in,
               max_block_bytes):
    """Pick a sublane-block size: big tiles, VMEM-bounded, >=2 grid steps."""
    tb = max(8, usable_bytes // max(bytes_per_row, 1))
    tb = min(tb, max(8, max_block_bytes // max(row_bytes_in, 1)))
    if total_rows >= 16:                      # keep >=2 steps for v7x megacore
        tb = min(tb, _round_up(_cdiv(total_rows, 2), 8))
    if tb >= total_rows:
        return total_rows                     # full extent -> always legal
    return max(8, (tb // 8) * 8)              # sublane-aligned partial blocks


def inv_model_forward(x, bi_tensor, *, max_block_mbytes=8):
    """Computes einsum('...i,ij,...j->...', x, bi_tensor, x) with Pallas."""
    lead_shape = x.shape[:-1]
    d = int(x.shape[-1])
    assert bi_tensor.shape == (d, d)
    n = math.prod(lead_shape) if lead_shape else 1
    res_dtype = jnp.result_type(x.dtype, bi_tensor.dtype)
    if n == 0 or d == 0:
        return jnp.zeros(lead_shape, res_dtype)

    in_isz = x.dtype.itemsize
    out_isz = jnp.dtype(res_dtype).itemsize
    vmem_limit = _vmem_budget_bytes()
    max_block_bytes = max_block_mbytes * 1024 * 1024

    W = (128 // math.gcd(d, 128)) * d          # lcm(d, 128): lane-dense rows
    wy = W // d                                # points per row
    fast = (d <= 8) and (n % wy == 0) and (n >= wy)

    if fast:
        R = n // wy
        roll_impl, roll_numpy_like = _roll_mode()

        # Fold B's coefficients once: pattern[0,i]=B[i,i]; pattern[s,i]=B[i,i+s]+B[i+s,i].
        C = bi_tensor.astype(jnp.float32)
        rows = [jnp.diagonal(C)]
        for s in range(1, d):
            off = jnp.diagonal(C, offset=s) + jnp.diagonal(C, offset=-s)
            rows.append(jnp.concatenate([off, jnp.zeros((s,), jnp.float32)]))
        pattern = jnp.stack(rows)                              # (d, d)
        w = jnp.tile(pattern, (1, W // d))                     # (d, W)
        sel = (jnp.arange(W)[:, None] // d ==
               jnp.arange(wy)[None, :]).astype(jnp.float32)    # (W, wy) 0/1

        xv = x.reshape(R, W)                                   # FREE reshape

        const_bytes = 2 * (d * W + W * wy) * 4
        per_row = 2 * W * in_isz + 5 * W * 4 + 3 * wy * 4      # dbuf + f32 temps
        usable = max(per_row * 8,
                     vmem_limit - const_bytes - 4 * 1024 * 1024)
        tb = _pick_rows(R, per_row, usable, W * in_isz, max_block_bytes)
        grid = (_cdiv(R, tb),)

        kernel = functools.partial(_interleaved_bilinear_kernel, d=d,
                                   roll_impl=roll_impl,
                                   roll_numpy_like=roll_numpy_like)
        out = pl.pallas_call(
            kernel,
            out_shape=jax.ShapeDtypeStruct((R, wy), res_dtype),
            grid=grid,
            in_specs=[
                pl.BlockSpec((d, W), lambda i: (0, 0)),        # weights (resident)
                pl.BlockSpec((W, wy), lambda i: (0, 0)),       # segment-sum matrix
                pl.BlockSpec((tb, W), lambda i: (i, 0)),       # x rows
            ],
            out_specs=pl.BlockSpec((tb, wy), lambda i: (i, 0)),
            compiler_params=pltpu.CompilerParams(
                dimension_semantics=("parallel",),
                vmem_limit_bytes=vmem_limit),
            cost_estimate=pl.CostEstimate(
                flops=2 * n * d * d + 2 * n * W,
                transcendentals=0,
                bytes_accessed=n * d * in_isz + n * out_isz + const_bytes),
        )(w, sel, xv)
        return out.reshape(lead_shape)

    # ---------------- fallback: natural (n, d) row-wise MXU path -------------
    dot_dtype = x.dtype if x.dtype in (jnp.bfloat16, jnp.float16) else jnp.float32
    b_arg = bi_tensor.astype(dot_dtype)
    xv = x.reshape(n, d)

    d_lanes = _round_up(d, 128)                 # VMEM lane padding estimate
    const_bytes = 2 * _round_up(d, 8) * d_lanes * jnp.dtype(dot_dtype).itemsize
    per_row = 2 * d_lanes * in_isz + 4 * d_lanes * 4 + 2 * 128 * 4
    usable = max(per_row * 8, vmem_limit - const_bytes - 4 * 1024 * 1024)
    tb = _pick_rows(n, per_row, usable, d_lanes * in_isz, max_block_bytes)
    grid = (_cdiv(n, tb),)
    # TODO(synk): for very large d (d*d bytes ~ VMEM), K-tile the contraction
    # over B with an f32 accumulator instead of loading all of B at once.

    out = pl.pallas_call(
        _rowwise_bilinear_kernel,
        out_shape=jax.ShapeDtypeStruct((n, 1), res_dtype),
        grid=grid,
        in_specs=[
            pl.BlockSpec((d, d), lambda i: (0, 0)),
            pl.BlockSpec((tb, d), lambda i: (i, 0)),
        ],
        out_specs=pl.BlockSpec((tb, 1), lambda i: (i, 0)),
        compiler_params=pltpu.CompilerParams(
            dimension_semantics=("parallel",),
            vmem_limit_bytes=vmem_limit),
        cost_estimate=pl.CostEstimate(
            flops=2 * n * d * d + 2 * n * d,
            transcendentals=0,
            bytes_accessed=n * d * in_isz + n * out_isz + d * d * 4),
    )(b_arg, xv)
    return out.reshape(lead_shape)


def make_bi_tensor(dinput=4, init="rand", key=None):
    """Deterministic parameter init mirroring inv_model.__init__."""
    if key is None:
        key = jax.random.PRNGKey(0)
    if init == "eta":
        diag = jnp.ones((dinput,), jnp.float32) * -1.0
        diag = diag.at[0].set(1.0)
        bi = jnp.diag(diag)
    elif init == "delta":
        bi = jnp.diag(jnp.ones((dinput,), jnp.float32))
    else:  # 'rand'
        bi = jax.random.normal(key, (dinput, dinput), jnp.float32)
    # symmetrize, exactly as the module does
    bi = (bi + bi.T) * 0.5
    return bi


if __name__ == "__main__":
    key = jax.random.PRNGKey(0)
    k_param, k1, k2, k3, k4, k5, k6 = jax.random.split(key, 7)

    d = 4
    bi = make_bi_tensor(dinput=d, init="rand", key=k_param)

    # 1) module-shaped small example: batch=2, seq=16, dinput=4 -> y (2, 16)
    x1 = jax.random.normal(k1, (2, 16, d), jnp.float32)
    y1 = jax.block_until_ready(inv_model_forward(x1, bi))
    r1 = jnp.einsum("...i,ij,...j->...", x1, bi, x1)
    assert y1.shape == r1.shape == (2, 16)
    assert jnp.allclose(y1, r1, atol=1e-3, rtol=1e-3)

    # 2) fast path with a multi-step grid (megacore-shardable)
    x2 = jax.random.normal(k2, (4096, d), jnp.float32)
    y2 = jax.block_until_ready(inv_model_forward(x2, bi))
    r2 = jnp.einsum("...i,ij,...j->...", x2, bi, x2)
    assert jnp.allclose(y2, r2, atol=1e-3, rtol=1e-3)

    # 3) batch not divisible by the fast-path group -> row-wise fallback path
    x3 = jax.random.normal(k3, (200, d), jnp.float32)
    y3 = jax.block_until_ready(inv_model_forward(x3, bi))
    r3 = jnp.einsum("...i,ij,...j->...", x3, bi, x3)
    assert jnp.allclose(y3, r3, atol=1e-3, rtol=1e-3)

    # 4) native bf16 DMA + in-kernel f32 math on the fast path
    x4 = jax.random.normal(k4, (64, d), jnp.float32).astype(jnp.bfloat16)
    y4 = jax.block_until_ready(inv_model_forward(x4, bi))
    r4 = jnp.einsum("...i,ij,...j->...",
                    x4.astype(jnp.float32), bi, x4.astype(jnp.float32))
    assert jnp.allclose(y4.astype(jnp.float32), r4, atol=1e-3, rtol=1e-3)

    # 5) larger dinput (d=12 > 8) -> MXU fallback path
    bi12 = make_bi_tensor(dinput=12, init="rand", key=k5)
    x5 = jax.random.normal(k6, (64, 12), jnp.float32)
    y5 = jax.block_until_ready(inv_model_forward(x5, bi12))
    r5 = jnp.einsum("...i,ij,...j->...", x5, bi12, x5)
    assert jnp.allclose(y5, r5, atol=1e-3, rtol=1e-3)

    print("KERNEL_OK")
</pallas_src>

<mosaic_0001>
module attributes {stable_mosaic.version = 11 : i64} {
  func.func @_probe(%arg0: memref<8x128xf32, #tpu.memory_space<vmem>>, %arg1: memref<8x128xf32, #tpu.memory_space<vmem>>) attributes {dimension_semantics = [], scalar_prefetch = 0 : i64, scratch_operands = 0 : i64, tpu.core_type = #tpu.core_type<tc>} {
    %c0 = arith.constant 0 : index
    %c0_0 = arith.constant 0 : index
    %0 = vector.load %arg0[%c0, %c0_0] : memref<8x128xf32, #tpu.memory_space<vmem>>, vector<8x128xf32>
    %c1_i32 = arith.constant 1 : i32
    %1 = tpu.dynamic_rotate %0 by %c1_i32 dim 1 : vector<8x128xf32>, i32 -> vector<8x128xf32>
    %c0_1 = arith.constant 0 : index
    %c0_2 = arith.constant 0 : index
    %2 = vector.load %arg1[%c0_1, %c0_2] : memref<8x128xf32, #tpu.memory_space<vmem>>, vector<8x128xf32>
    tpu.vector_store %arg1[%c0_1, %c0_2], %1 {strides = array<i32>} : memref<8x128xf32, #tpu.memory_space<vmem>>, vector<8x128xf32>,
    return
  }
}

module attributes {stable_mosaic.version = 11 : i64} {
  func.func @_interleaved_bilinear_kernel(%arg0: i32, %arg1: memref<4x128xf32, #tpu.memory_space<vmem>>, %arg2: memref<128x32xf32, #tpu.memory_space<vmem>>, %arg3: memref<1x128xf32, #tpu.memory_space<vmem>>, %arg4: memref<1x32xf32, #tpu.memory_space<vmem>>) attributes {dimension_semantics = [#tpu.dimension_semantics<parallel>], iteration_bounds = array<i64: 1>, scalar_prefetch = 0 : i64, scratch_operands = 0 : i64, tpu.core_type = #tpu.core_type<tc>, window_params = [{pipeline_mode = #tpu.pipeline_mode<synchronous>, transform_indices = @transform_0, window_bounds = array<i64: 4, 128>}, {pipeline_mode = #tpu.pipeline_mode<synchronous>, transform_indices = @transform_1, window_bounds = array<i64: 128, 32>}, {transform_indices = @transform_2, window_bounds = array<i64: 1, 128>}, {transform_indices = @transform_3, window_bounds = array<i64: 1, 32>}]} {
    %c0 = arith.constant 0 : index
    %c0_0 = arith.constant 0 : index
    %0 = vector.load %arg3[%c0, %c0_0] : memref<1x128xf32, #tpu.memory_space<vmem>>, vector<1x128xf32>
    %c0_1 = arith.constant 0 : index
    %c0_2 = arith.constant 0 : index
    %1 = vector.load %arg1[%c0_1, %c0_2] : memref<4x128xf32, #tpu.memory_space<vmem>>, vector<1x128xf32>
    %2 = arith.mulf %1, %0 : vector<1x128xf32>
    %3 = vector.extract_strided_slice %0 {offsets = [0, 1], sizes = [1, 127], strides = [1, 1]} : vector<1x128xf32> to vector<1x127xf32>
    %4 = vector.extract_strided_slice %0 {offsets = [0, 0], sizes = [1, 1], strides = [1, 1]} : vector<1x128xf32> to vector<1x1xf32>
    %5 = tpu.concatenate %3, %4 in 1 : vector<1x127xf32>, vector<1x1xf32> -> vector<1x128xf32>
    %c1 = arith.constant 1 : index
    %c0_3 = arith.constant 0 : index
    %6 = vector.load %arg1[%c1, %c0_3] : memref<4x128xf32, #tpu.memory_space<vmem>>, vector<1x128xf32>
    %7 = arith.mulf %6, %5 : vector<1x128xf32>
    %8 = arith.addf %2, %7 : vector<1x128xf32>
    %9 = vector.extract_strided_slice %0 {offsets = [0, 2], sizes = [1, 126], strides = [1, 1]} : vector<1x128xf32> to vector<1x126xf32>
    %10 = vector.extract_strided_slice %0 {offsets = [0, 0], sizes = [1, 2], strides = [1, 1]} : vector<1x128xf32> to vector<1x2xf32>
    %11 = tpu.concatenate %9, %10 in 1 : vector<1x126xf32>, vector<1x2xf32> -> vector<1x128xf32>
    %c2 = arith.constant 2 : index
    %c0_4 = arith.constant 0 : index
    %12 = vector.load %arg1[%c2, %c0_4] : memref<4x128xf32, #tpu.memory_space<vmem>>, vector<1x128xf32>
    %13 = arith.mulf %12, %11 : vector<1x128xf32>
    %14 = arith.addf %8, %13 : vector<1x128xf32>
    %15 = vector.extract_strided_slice %0 {offsets = [0, 3], sizes = [1, 125], strides = [1, 1]} : vector<1x128xf32> to vector<1x125xf32>
    %16 = vector.extract_strided_slice %0 {offsets = [0, 0], sizes = [1, 3], strides = [1, 1]} : vector<1x128xf32> to vector<1x3xf32>
    %17 = tpu.concatenate %15, %16 in 1 : vector<1x125xf32>, vector<1x3xf32> -> vector<1x128xf32>
    %c3 = arith.constant 3 : index
    %c0_5 = arith.constant 0 : index
    %18 = vector.load %arg1[%c3, %c0_5] : memref<4x128xf32, #tpu.memory_space<vmem>>, vector<1x128xf32>
    %19 = arith.mulf %18, %17 : vector<1x128xf32>
    %20 = arith.addf %14, %19 : vector<1x128xf32>
    %21 = arith.mulf %0, %20 : vector<1x128xf32>
    %c0_6 = arith.constant 0 : index
    %c0_7 = arith.constant 0 : index
    %22 = vector.load %arg2[%c0_6, %c0_7] : memref<128x32xf32, #tpu.memory_space<vmem>>, vector<128x32xf32>
    %cst = arith.constant dense<0.000000e+00> : vector<1x32xf32>
    %23 = tpu.matmul %21, %22, %cst {dimension_numbers = #tpu.dot_dimension_numbers<[1], [0], [0], [1], [0, 0, 1, 1], [], []>} : vector<1x128xf32>, vector<128x32xf32>, vector<1x32xf32> -> vector<1x32xf32>
    %c0_8 = arith.constant 0 : index
    %c0_9 = arith.constant 0 : index
    %24 = vector.load %arg4[%c0_8, %c0_9] : memref<1x32xf32, #tpu.memory_space<vmem>>, vector<1x32xf32>
    tpu.vector_store %arg4[%c0_8, %c0_9], %23 {strides = array<i32>} : memref<1x32xf32, #tpu.memory_space<vmem>>, vector<1x32xf32>,
    return
  }
  func.func @transform_0(%arg0: i32) -> (i32, i32) {
    %c0_i32 = arith.constant 0 : i32
    %c0_i32_0 = arith.constant 0 : i32
    %c0_i32_1 = arith.constant 0 : i32
    return %c0_i32, %c0_i32_0 : i32, i32
  }
  func.func @transform_1(%arg0: i32) -> (i32, i32) {
    %c0_i32 = arith.constant 0 : i32
    %c0_i32_0 = arith.constant 0 : i32
    %c0_i32_1 = arith.constant 0 : i32
    return %c0_i32, %c0_i32_0 : i32, i32
  }
  func.func @transform_2(%arg0: i32) -> (i32, i32) {
    %c0_i32 = arith.constant 0 : i32
    %c0_i32_0 = arith.constant 0 : i32
    return %arg0, %c0_i32 : i32, i32
  }
  func.func @transform_3(%arg0: i32) -> (i32, i32) {
    %c0_i32 = arith.constant 0 : i32
    %c0_i32_0 = arith.constant 0 : i32
    return %arg0, %c0_i32 : i32, i32
  }
}

</mosaic_0001>

<llo_original>
// kernel: tpu_custom_call.1
$region0: #{tpu_custom_call.1}
  #allocation0 [shape = 'u32[]', space=smem, size = 0x4, offset = 0x4, fixed_abs, tag = 'smem constant byte address 0x4 - core index']
  #allocation1 [shape = 'u32[72,128]{1,0:T(1,128)}', space=vmem, size = 0x9000, scoped, tag = 'internal scratch']
  %s0 = inlined_call_operand.hbm [shape: f32[8,128], index: 0, kind: input, shape index: {}]
  %s1 = inlined_call_operand.hbm [shape: f32[8,128], index: 1, kind: output, shape index: {}]
  %s2 = sld [smem:[#allocation0]]
  $region18: #{tpu_custom_call.1} parent=0
    _
  %s4 = ssub.s32 1, %s2
  %s5 = scalar_select 0, %s4, %s2
  $region1: #{tpu_custom_call.1} parent=0
    #allocation2 [shape = 'u8[4096]{0}', space=vmem, size = 0x1000, scoped, tag = 'input window, operand 0, single buffered']
    #allocation3 [shape = 's32[1]{0}', space=sflag, size = 0x4, scoped, tag = 'scoped memory for tpu_custom_call.1']
    #allocation4 [shape = 's32[1]{0}', space=sflag, size = 0x4, scoped, tag = 'scoped memory for tpu_custom_call.1']
    #allocation5 [shape = 'u8[4096]{0}', space=vmem, size = 0x1000, scoped, tag = 'output window, operand 0, single buffered']
    %6 = vsyncpa [#allocation3], 0
    %7 = vsyncpa [#allocation4], 0
    // Predicated region
    $region2: #{tpu_custom_call.1} parent=1 // pred_check
      _
    $region3: #{tpu_custom_call.1} parent=1 // pred_check_branch
      %9 = sbr.rel (0) target = $region5
    $region4: #{tpu_custom_call.1} parent=1 // pred_region
      %11 = vsyncadd [#allocation3], 0
      %s13 = sshll.u32 %s0, 4
      %s14 = int_to_ptr.hbm [resolvable:$true] %s13
      %s15 = sshll.u32 [#allocation2], 4
      %s16 = int_to_ptr.vmem [resolvable:$true] %s15
      %18 = dma.hbm_to_vmem [thread:$0]  %s14, 128, %s16, [#allocation3]
    $region5: #{tpu_custom_call.1} parent=1 // pred_fallthru
      _
    // Predicated region
    $region6: #{tpu_custom_call.1} parent=1 // pred_check
      _
    $region7: #{tpu_custom_call.1} parent=1 // pred_check_branch
      %20 = sbr.rel (0) target = $region9
    $region8: #{tpu_custom_call.1} parent=1 // pred_region
      %22 = dma.done [#allocation3], 128
    $region9: #{tpu_custom_call.1} parent=1 // pred_fallthru
      _
    %v23 = vld [vmem:[#allocation2] sm:$0xff]
    %24 = vrot.lane.b32.xlu0 %v23, 1
    %v25 = vpop.permute.xlu0 %24
    %26 = vst [vmem:[#allocation5] sm:$0xff] %v25
    // Predicated region
    $region10: #{tpu_custom_call.1} parent=1 // pred_check
      _
    $region11: #{tpu_custom_call.1} parent=1 // pred_check_branch
      %28 = sbr.rel (0) target = $region13
    $region12: #{tpu_custom_call.1} parent=1 // pred_region
      %30 = vsyncadd [#allocation4], 0
      %s32 = sshll.u32 [#allocation5], 4
      %s33 = int_to_ptr.vmem [resolvable:$true] %s32
      %s34 = sshll.u32 %s1, 4
      %s35 = int_to_ptr.hbm [resolvable:$true] %s34
      %37 = dma.vmem_to_hbm [thread:$0]  %s33, 128, %s35, [#allocation4]
    $region13: #{tpu_custom_call.1} parent=1 // pred_fallthru
      _
    // Predicated region
    $region14: #{tpu_custom_call.1} parent=1 // pred_check
      _
    $region15: #{tpu_custom_call.1} parent=1 // pred_check_branch
      %39 = sbr.rel (0) target = $region17
    $region16: #{tpu_custom_call.1} parent=1 // pred_region
      %41 = dma.done [#allocation4], 128
    $region17: #{tpu_custom_call.1} parent=1 // pred_fallthru
      _
    %42 = vsyncpa [#allocation3], 1
    %43 = vsyncpa [#allocation4], 1

// kernel: tpu_custom_call.1
$region0: #{tpu_custom_call.1}
  #allocation0 [shape = 'u32[]', space=smem, size = 0x4, offset = 0x4, fixed_abs, tag = 'smem constant byte address 0x4 - core index']
  #allocation1 [shape = 'u32[72,128]{1,0:T(1,128)}', space=vmem, size = 0x9000, scoped, tag = 'internal scratch']
  %s0 = inlined_call_operand.vmem [shape: f32[4,128], index: 0, kind: input, shape index: {}]
  %s1 = inlined_call_operand.vmem [shape: f32[128,32], index: 1, kind: input, shape index: {}]
  %s2 = inlined_call_operand.vmem [shape: f32[1,128], index: 2, kind: input, shape index: {}]
  %s3 = inlined_call_operand.hbm [shape: f32[1,32], index: 3, kind: output, shape index: {}]
  %s4 = sld [smem:[#allocation0]]
  $region22: #{tpu_custom_call.1} parent=0
    _
  %s6 = ssub.s32 1, %s4
  %s7 = scalar_select 0, %s6, %s4
  $region1: #{tpu_custom_call.1} parent=0
    #allocation2 [shape = 'u8[512]{0}', space=vmem, size = 0x400, scoped, tag = 'output window, operand 0, single buffered']
    #allocation3 [shape = 's32[1]{0}', space=sflag, size = 0x4, scoped, tag = 'scoped memory for tpu_custom_call.1']
    %8 = vsyncpa [#allocation3], 0
    // Predicated region
    $region2: #{tpu_custom_call.1} parent=1 // pred_check
      _
    $region3: #{tpu_custom_call.1} parent=1 // pred_check_branch
      %10 = sbr.rel (0) target = $region5
    $region4: #{tpu_custom_call.1} parent=1 // pred_region
      _
    $region5: #{tpu_custom_call.1} parent=1 // pred_fallthru
      _
    // Predicated region
    $region6: #{tpu_custom_call.1} parent=1 // pred_check
      _
    $region7: #{tpu_custom_call.1} parent=1 // pred_check_branch
      %12 = sbr.rel (0) target = $region9
    $region8: #{tpu_custom_call.1} parent=1 // pred_region
      _
    $region9: #{tpu_custom_call.1} parent=1 // pred_fallthru
      _
    // Predicated region
    $region10: #{tpu_custom_call.1} parent=1 // pred_check
      _
    $region11: #{tpu_custom_call.1} parent=1 // pred_check_branch
      %14 = sbr.rel (0) target = $region13
    $region12: #{tpu_custom_call.1} parent=1 // pred_region
      _
    $region13: #{tpu_custom_call.1} parent=1 // pred_fallthru
      _
    %v15 = vld [vmem:[%s2] sm:$0x1]
    %v16 = vld [vmem:[%s0] sm:$0x1]
    %v17 = vmul.f32 %v16, %v15
    %v19 = vperm.slane %v15, 0
    %20 = vrot.lane.b32.xlu0 %v19, 127
    %v21 = vpop.permute.xlu0 %20
    %v23 = vld [vmem:[%s0 + $0x1] sm:$0x1]
    %v24 = vmul.f32 %v23, %v21
    %v25 = vadd.f32 %v17, %v24
    %26 = vrot.lane.b32.xlu0 %v19, 126
    %v27 = vpop.permute.xlu0 %26
    %v29 = vld [vmem:[%s0 + $0x2] sm:$0x1]
    %v30 = vmul.f32 %v29, %v27
    %v31 = vadd.f32 %v25, %v30
    %32 = vrot.lane.b32.xlu0 %v19, 125
    %v33 = vpop.permute.xlu0 %32
    %v35 = vld [vmem:[%s0 + $0x3] sm:$0x1]
    %v36 = vmul.f32 %v35, %v33
    %v37 = vadd.f32 %v31, %v36
    %v38 = vmul.f32 %v15, %v37
    %v39 = vld [vmem:[%s1] sm:$0xff]
    %v40 = vld [vmem:[%s1 + $0x8] sm:$0xff]
    %v41 = vld [vmem:[%s1 + $0x10] sm:$0xff]
    %v42 = vld [vmem:[%s1 + $0x18] sm:$0xff]
    %v43 = vld [vmem:[%s1 + $0x20] sm:$0xff]
    %v44 = vld [vmem:[%s1 + $0x28] sm:$0xff]
    %v45 = vld [vmem:[%s1 + $0x30] sm:$0xff]
    %v46 = vld [vmem:[%s1 + $0x38] sm:$0xff]
    %v47 = vld [vmem:[%s1 + $0x40] sm:$0xff]
    %v48 = vld [vmem:[%s1 + $0x48] sm:$0xff]
    %v49 = vld [vmem:[%s1 + $0x50] sm:$0xff]
    %v50 = vld [vmem:[%s1 + $0x58] sm:$0xff]
    %v51 = vld [vmem:[%s1 + $0x60] sm:$0xff]
    %v52 = vld [vmem:[%s1 + $0x68] sm:$0xff]
    %v53 = vld [vmem:[%s1 + $0x70] sm:$0xff]
    %v54 = vld [vmem:[%s1 + $0x78] sm:$0xff]
    %55 = vmatpush.msra.mxu0 %v54
    %56 = vmatpush.msra.mxu0 %v53
    %57 = vmatpush.msra.mxu0 %v52
    %58 = vmatpush.msra.mxu0 %v51
    %59 = vmatpush.msra.mxu0 %v50
    %60 = vmatpush.msra.mxu0 %v49
    %61 = vmatpush.msra.mxu0 %v48
    %62 = vmatpush.msra.mxu0 %v47
    %63 = vmatpush.msra.mxu0 %v46
    %64 = vmatpush.msra.mxu0 %v45
    %65 = vmatpush.msra.mxu0 %v44
    %66 = vmatpush.msra.mxu0 %v43
    %67 = vmatpush.msra.mxu0 %v42
    %68 = vmatpush.msra.mxu0 %v41
    %69 = vmatpush.msra.mxu0 %v40
    %70 = vmatpush.msra.mxu0 %v39
    %71 = vmatmul.f32.gmra.mxu0 %v38
    %v72 = vpop.f32.mrf.mxu0
    %v73 = vadd.f32 0.0, %v72
    %74 = vdwg.mxu0
    %vm75 = vcmask 253952
    %76 = vst.msk [vmem:[#allocation2] sm:$0x1] %vm75, %v73
    // Predicated region
    $region14: #{tpu_custom_call.1} parent=1 // pred_check
      _
    $region15: #{tpu_custom_call.1} parent=1 // pred_check_branch
      %78 = sbr.rel (0) target = $region17
    $region16: #{tpu_custom_call.1} parent=1 // pred_region
      %80 = vsyncadd [#allocation3], 0
      %s82 = sshll.u32 [#allocation2], 4
      %s83 = int_to_ptr.vmem [resolvable:$true] %s82
      %s84 = sshll.u32 %s3, 4
      %s85 = int_to_ptr.hbm [resolvable:$true] %s84
      %87 = dma.vmem_to_hbm [thread:$0]  %s83, 16, %s85, [#allocation3]
    $region17: #{tpu_custom_call.1} parent=1 // pred_fallthru
      _
    // Predicated region
    $region18: #{tpu_custom_call.1} parent=1 // pred_check
      _
    $region19: #{tpu_custom_call.1} parent=1 // pred_check_branch
      %89 = sbr.rel (0) target = $region21
    $region20: #{tpu_custom_call.1} parent=1 // pred_region
      %91 = dma.done [#allocation3], 16
    $region21: #{tpu_custom_call.1} parent=1 // pred_fallthru
      _
    %92 = vsyncpa [#allocation3], 1

</llo_original>
